<compile_context>
chip_gen: v6e
topology: v6e:2x2x1
jax: 0.10.0
libtpu: 0.0.40
codegen_flags: <defaults>
</compile_context>

<pallas_src>
import functools

import jax
import jax.numpy as jnp
from jax.experimental import pallas as pl
from jax.experimental.pallas import tpu as pltpu


def _round_up(x, m):
    return -(-x // m) * m


def _decoder_kernel(n_layers, *refs):
    """Fused MLP decoder for one batch tile.

    refs layout: [x_ref, (w_ref, b_ref) * n_layers, out_ref]
    Layers 0..n_layers-2 use ReLU; the last layer uses sigmoid.
    Matmuls run on the MXU with f32 accumulation.
    """
    x_ref = refs[0]
    out_ref = refs[-1]
    wb_refs = refs[1:-1]

    h = x_ref[...].astype(jnp.float32)
    for layer in range(n_layers):
        w_ref = wb_refs[2 * layer]
        b_ref = wb_refs[2 * layer + 1]
        acc = jnp.dot(h.astype(w_ref.dtype), w_ref[...],
                      preferred_element_type=jnp.float32)
        acc = acc + b_ref[...].astype(jnp.float32)
        if layer < n_layers - 1:
            h = jnp.maximum(acc, 0.0)        # ReLU (VPU, f32)
        else:
            h = jax.nn.sigmoid(acc)          # Sigmoid (EUP exp + reciprocal)
    out_ref[...] = h.astype(out_ref.dtype)


def _choose_tile_b(batch, requested=None):
    """Pick a batch tile balancing per-step overhead vs. padding waste."""
    b8 = _round_up(max(batch, 8), 8)
    if requested is not None:
        return max(8, min(_round_up(requested, 8), b8))
    # Small batches: one tile covering the whole (8-row-padded) batch.
    if b8 <= 512:
        return b8
    # Large batches: biggest candidate with <=~10% padding waste and >=2 grid
    # steps (lets the "parallel" batch axis use both v7x TensorCores).
    best = 128
    for cand in (128, 256, 512, 1024):
        padded = _round_up(b8, cand)
        if padded // cand >= 2 and (padded - batch) * 10 <= padded:
            best = cand
    return best


def _pad_params(weights, biases, compute_dtype):
    """Lane-pad every layer's output dim to a multiple of 128 (and the next
    layer's input rows to match). Zero padding keeps the math exact."""
    ws, bs = [], []
    in_pad = weights[0].shape[0]             # z_dim stays unpadded (full-dim block)
    for w, b in zip(weights, biases):
        d_in, d_out = w.shape
        out_pad = _round_up(d_out, 128)
        w = jnp.pad(w, ((0, in_pad - d_in), (0, out_pad - d_out)))
        b = jnp.pad(jnp.reshape(b, (1, -1)), ((0, 0), (0, out_pad - d_out)))
        ws.append(w.astype(compute_dtype))
        bs.append(b.astype(jnp.float32))
        in_pad = out_pad
    return ws, bs


def mlp_decoder_forward(z, weights, biases, *, tile_b=None,
                        compute_dtype=jnp.float32, out_dtype=jnp.float32):
    """Run the fused decoder kernel.

    z:       (B, z_dim) float32
    weights: list of (in, out) float32 arrays   (PyTorch weight.T)
    biases:  list of (out,) or (1, out) float32 arrays
    returns: (B, 1, 28, 28) out_dtype  (f32 default, matching PyTorch)
    """
    n_layers = len(weights)
    batch, z_dim = z.shape
    out_dim = weights[-1].shape[1]                     # 784
    z = z.astype(jnp.float32)

    # Lane-pad all layer widths to multiples of 128 (784 -> 896 etc.).
    ws, bs = _pad_params(weights, biases, compute_dtype)
    out_pad = ws[-1].shape[1]                          # 896 = 7 * 128

    # Adaptive batch tiling (keeps padding waste small; padded rows are
    # pure wasted HBM writeback in this writeback-bound kernel).
    tile_b = _choose_tile_b(batch, tile_b)
    b_padded = _round_up(max(batch, 8), tile_b)
    if b_padded != batch:
        z = jnp.pad(z, ((0, b_padded - batch), (0, 0)))
    grid = (b_padded // tile_b,)

    flat_inputs = [z]
    in_specs = [pl.BlockSpec((tile_b, z_dim), lambda i: (i, 0))]
    for w, b in zip(ws, bs):
        flat_inputs += [w, b]
        # Weights / biases are grid-invariant -> stay resident in VMEM.
        in_specs.append(pl.BlockSpec(w.shape, lambda i: (0, 0)))
        in_specs.append(pl.BlockSpec(b.shape, lambda i: (0, 0)))

    # Advisory cost estimate (sigmoid ~ 2 transcendentals per element).
    dims = [z_dim] + [w.shape[1] for w in ws]
    flops = 2 * b_padded * sum(di * do for di, do in zip(dims[:-1], dims[1:]))
    param_bytes = sum(int(x.size) * x.dtype.itemsize for x in ws + bs)
    out_itemsize = jnp.dtype(out_dtype).itemsize
    bytes_accessed = int(z.size) * 4 + param_bytes + b_padded * out_pad * out_itemsize
    cost = pl.CostEstimate(flops=int(flops),
                           transcendentals=int(2 * b_padded * out_pad),
                           bytes_accessed=int(bytes_accessed))

    # Only raise the scoped-VMEM ceiling if the footprint needs it (v5e default
    # scope is 16 MiB); never request anywhere near physical VMEM.
    vmem_est = (2 * tile_b * out_pad * out_itemsize        # out double-buffer
                + 2 * tile_b * z_dim * 4                   # in double-buffer
                + param_bytes
                + 3 * tile_b * out_pad * 4)                # f32 temporaries headroom
    cp_kwargs = dict(dimension_semantics=("parallel",))
    if vmem_est > 12 * 1024 * 1024:
        cp_kwargs["vmem_limit_bytes"] = min(int(1.5 * vmem_est), 48 * 1024 * 1024)

    kernel = functools.partial(_decoder_kernel, n_layers)
    out_flat = pl.pallas_call(
        kernel,
        out_shape=jax.ShapeDtypeStruct((b_padded, out_pad), out_dtype),
        grid=grid,
        in_specs=in_specs,
        out_specs=pl.BlockSpec((tile_b, out_pad), lambda i: (i, 0)),
        compiler_params=pltpu.CompilerParams(**cp_kwargs),
        cost_estimate=cost,
    )(*flat_inputs)

    # Strip batch / lane padding, then NCHW view matching `out.view(-1,1,28,28)`.
    return out_flat[:batch, :out_dim].reshape(-1, 1, 28, 28)


def init_params(key, z_dim, dim_list, out_dim=28 * 28):
    """Deterministic PyTorch-style init: U(-1/sqrt(fan_in), 1/sqrt(fan_in)).

    Returns weights as (in, out) and biases as (1, out), all f32.
    """
    layer_dims = [z_dim] + list(dim_list) + [out_dim]
    weights, biases = [], []
    for i in range(len(layer_dims) - 1):
        fan_in, fan_out = layer_dims[i], layer_dims[i + 1]
        key, kw, kb = jax.random.split(key, 3)
        bound = 1.0 / jnp.sqrt(jnp.float32(fan_in))
        w = jax.random.uniform(kw, (fan_in, fan_out), jnp.float32, -bound, bound)
        b = jax.random.uniform(kb, (1, fan_out), jnp.float32, -bound, bound)
        weights.append(w)
        biases.append(b)
    return weights, biases


def reference_forward(z, weights, biases):
    """Pure-JAX f32 reference for correctness checking."""
    h = z
    for i, (w, b) in enumerate(zip(weights, biases)):
        h = h @ w + b
        if i < len(weights) - 1:
            h = jnp.maximum(h, 0.0)
        else:
            h = jax.nn.sigmoid(h)
    return h.reshape(-1, 1, 28, 28)


if __name__ == "__main__":
    key = jax.random.PRNGKey(0)

    # Small shapes consistent with the module: z_dim=16, dim_list=[32, 64], batch=8.
    batch, z_dim = 8, 16
    dim_list = [32, 64]

    key, kz, kp = jax.random.split(key, 3)
    z = jax.random.normal(kz, (batch, z_dim), jnp.float32)
    weights, biases = init_params(kp, z_dim, dim_list)

    out = mlp_decoder_forward(z, weights, biases)
    out = jax.block_until_ready(out)

    ref = reference_forward(z, weights, biases)

    assert out.shape == (batch, 1, 28, 28), out.shape
    assert out.dtype == jnp.float32
    # f32 matmuls with f32 accumulation: near-exact parity with the reference.
    assert jnp.allclose(out, ref, atol=1e-4, rtol=1e-4), (
        float(jnp.max(jnp.abs(out - ref)))
    )
    print("KERNEL_OK")
</pallas_src>

<mosaic_0001>
module attributes {stable_mosaic.version = 11 : i64} {
  func.func @_decoder_kernel(%arg0: i32, %arg1: memref<8x16xf32, #tpu.memory_space<vmem>>, %arg2: memref<16x128xf32, #tpu.memory_space<vmem>>, %arg3: memref<1x128xf32, #tpu.memory_space<vmem>>, %arg4: memref<128x128xf32, #tpu.memory_space<vmem>>, %arg5: memref<1x128xf32, #tpu.memory_space<vmem>>, %arg6: memref<128x896xf32, #tpu.memory_space<vmem>>, %arg7: memref<1x896xf32, #tpu.memory_space<vmem>>, %arg8: memref<8x896xf32, #tpu.memory_space<vmem>>) attributes {dimension_semantics = [#tpu.dimension_semantics<parallel>], iteration_bounds = array<i64: 1>, scalar_prefetch = 0 : i64, scratch_operands = 0 : i64, tpu.core_type = #tpu.core_type<tc>, window_params = [{transform_indices = @transform_0, window_bounds = array<i64: 8, 16>}, {pipeline_mode = #tpu.pipeline_mode<synchronous>, transform_indices = @transform_1, window_bounds = array<i64: 16, 128>}, {pipeline_mode = #tpu.pipeline_mode<synchronous>, transform_indices = @transform_2, window_bounds = array<i64: 1, 128>}, {pipeline_mode = #tpu.pipeline_mode<synchronous>, transform_indices = @transform_3, window_bounds = array<i64: 128, 128>}, {pipeline_mode = #tpu.pipeline_mode<synchronous>, transform_indices = @transform_4, window_bounds = array<i64: 1, 128>}, {pipeline_mode = #tpu.pipeline_mode<synchronous>, transform_indices = @transform_5, window_bounds = array<i64: 128, 896>}, {pipeline_mode = #tpu.pipeline_mode<synchronous>, transform_indices = @transform_6, window_bounds = array<i64: 1, 896>}, {transform_indices = @transform_7, window_bounds = array<i64: 8, 896>}]} {
    %c0 = arith.constant 0 : index
    %c0_0 = arith.constant 0 : index
    %0 = vector.load %arg1[%c0, %c0_0] : memref<8x16xf32, #tpu.memory_space<vmem>>, vector<8x16xf32>
    %c0_1 = arith.constant 0 : index
    %c0_2 = arith.constant 0 : index
    %1 = vector.load %arg2[%c0_1, %c0_2] : memref<16x128xf32, #tpu.memory_space<vmem>>, vector<16x128xf32>
    %cst = arith.constant dense<0.000000e+00> : vector<8x128xf32>
    %2 = tpu.matmul %0, %1, %cst {dimension_numbers = #tpu.dot_dimension_numbers<[1], [0], [0], [1], [0, 0, 1, 1], [], []>} : vector<8x16xf32>, vector<16x128xf32>, vector<8x128xf32> -> vector<8x128xf32>
    %c0_3 = arith.constant 0 : index
    %c0_4 = arith.constant 0 : index
    %3 = vector.load %arg3[%c0_3, %c0_4] : memref<1x128xf32, #tpu.memory_space<vmem>>, vector<1x128xf32>
    %4 = vector.broadcast %3 : vector<1x128xf32> to vector<8x128xf32>
    %5 = arith.addf %2, %4 : vector<8x128xf32>
    %cst_5 = arith.constant 0.000000e+00 : f32
    %6 = vector.broadcast %cst_5 : f32 to vector<8x128xf32>
    %7 = arith.maximumf %5, %6 : vector<8x128xf32>
    %c0_6 = arith.constant 0 : index
    %c0_7 = arith.constant 0 : index
    %8 = vector.load %arg4[%c0_6, %c0_7] : memref<128x128xf32, #tpu.memory_space<vmem>>, vector<128x128xf32>
    %cst_8 = arith.constant dense<0.000000e+00> : vector<8x128xf32>
    %9 = tpu.matmul %7, %8, %cst_8 {dimension_numbers = #tpu.dot_dimension_numbers<[1], [0], [0], [1], [0, 0, 1, 1], [], []>} : vector<8x128xf32>, vector<128x128xf32>, vector<8x128xf32> -> vector<8x128xf32>
    %c0_9 = arith.constant 0 : index
    %c0_10 = arith.constant 0 : index
    %10 = vector.load %arg5[%c0_9, %c0_10] : memref<1x128xf32, #tpu.memory_space<vmem>>, vector<1x128xf32>
    %11 = vector.broadcast %10 : vector<1x128xf32> to vector<8x128xf32>
    %12 = arith.addf %9, %11 : vector<8x128xf32>
    %cst_11 = arith.constant 0.000000e+00 : f32
    %13 = vector.broadcast %cst_11 : f32 to vector<8x128xf32>
    %14 = arith.maximumf %12, %13 : vector<8x128xf32>
    %c0_12 = arith.constant 0 : index
    %c0_13 = arith.constant 0 : index
    %15 = vector.load %arg6[%c0_12, %c0_13] : memref<128x896xf32, #tpu.memory_space<vmem>>, vector<128x896xf32>
    %cst_14 = arith.constant dense<0.000000e+00> : vector<8x896xf32>
    %16 = tpu.matmul %14, %15, %cst_14 {dimension_numbers = #tpu.dot_dimension_numbers<[1], [0], [0], [1], [0, 0, 1, 1], [], []>} : vector<8x128xf32>, vector<128x896xf32>, vector<8x896xf32> -> vector<8x896xf32>
    %c0_15 = arith.constant 0 : index
    %c0_16 = arith.constant 0 : index
    %17 = vector.load %arg7[%c0_15, %c0_16] : memref<1x896xf32, #tpu.memory_space<vmem>>, vector<1x896xf32>
    %18 = vector.broadcast %17 : vector<1x896xf32> to vector<8x896xf32>
    %19 = arith.addf %16, %18 : vector<8x896xf32>
    %20 = arith.negf %19 : vector<8x896xf32>
    %21 = math.exp %20 : vector<8x896xf32>
    %cst_17 = arith.constant 1.000000e+00 : f32
    %22 = vector.broadcast %cst_17 : f32 to vector<8x896xf32>
    %23 = arith.addf %22, %21 : vector<8x896xf32>
    %24 = arith.divf %22, %23 : vector<8x896xf32>
    %c0_18 = arith.constant 0 : index
    %c0_19 = arith.constant 0 : index
    %25 = vector.load %arg8[%c0_18, %c0_19] : memref<8x896xf32, #tpu.memory_space<vmem>>, vector<8x896xf32>
    tpu.vector_store %arg8[%c0_18, %c0_19], %24 {strides = array<i32>} : memref<8x896xf32, #tpu.memory_space<vmem>>, vector<8x896xf32>,
    return
  }
  func.func @transform_0(%arg0: i32) -> (i32, i32) {
    %c0_i32 = arith.constant 0 : i32
    %c0_i32_0 = arith.constant 0 : i32
    return %arg0, %c0_i32 : i32, i32
  }
  func.func @transform_1(%arg0: i32) -> (i32, i32) {
    %c0_i32 = arith.constant 0 : i32
    %c0_i32_0 = arith.constant 0 : i32
    %c0_i32_1 = arith.constant 0 : i32
    return %c0_i32, %c0_i32_0 : i32, i32
  }
  func.func @transform_2(%arg0: i32) -> (i32, i32) {
    %c0_i32 = arith.constant 0 : i32
    %c0_i32_0 = arith.constant 0 : i32
    %c0_i32_1 = arith.constant 0 : i32
    return %c0_i32, %c0_i32_0 : i32, i32
  }
  func.func @transform_3(%arg0: i32) -> (i32, i32) {
    %c0_i32 = arith.constant 0 : i32
    %c0_i32_0 = arith.constant 0 : i32
    %c0_i32_1 = arith.constant 0 : i32
    return %c0_i32, %c0_i32_0 : i32, i32
  }
  func.func @transform_4(%arg0: i32) -> (i32, i32) {
    %c0_i32 = arith.constant 0 : i32
    %c0_i32_0 = arith.constant 0 : i32
    %c0_i32_1 = arith.constant 0 : i32
    return %c0_i32, %c0_i32_0 : i32, i32
  }
  func.func @transform_5(%arg0: i32) -> (i32, i32) {
    %c0_i32 = arith.constant 0 : i32
    %c0_i32_0 = arith.constant 0 : i32
    %c0_i32_1 = arith.constant 0 : i32
    return %c0_i32, %c0_i32_0 : i32, i32
  }
  func.func @transform_6(%arg0: i32) -> (i32, i32) {
    %c0_i32 = arith.constant 0 : i32
    %c0_i32_0 = arith.constant 0 : i32
    %c0_i32_1 = arith.constant 0 : i32
    return %c0_i32, %c0_i32_0 : i32, i32
  }
  func.func @transform_7(%arg0: i32) -> (i32, i32) {
    %c0_i32 = arith.constant 0 : i32
    %c0_i32_0 = arith.constant 0 : i32
    return %arg0, %c0_i32 : i32, i32
  }
}

</mosaic_0001>

<llo_original>
// kernel: tpu_custom_call.1
$region0: #{tpu_custom_call.1}
  #allocation0 [shape = 'u32[]', space=smem, size = 0x4, offset = 0x4, fixed_abs, tag = 'smem constant byte address 0x4 - core index']
  #allocation1 [shape = 'u32[144,128]{1,0:T(1,128)}', space=vmem, size = 0x12000, scoped, tag = 'internal scratch']
  %s0 = inlined_call_operand.hbm [shape: f32[8,16], index: 0, kind: input, shape index: {}]
  %s1 = inlined_call_operand.hbm [shape: f32[16,128], index: 1, kind: input, shape index: {}]
  %s2 = inlined_call_operand.vmem [shape: f32[1,128], index: 2, kind: input, shape index: {}]
  %s3 = inlined_call_operand.hbm [shape: f32[128,128], index: 3, kind: input, shape index: {}]
  %s4 = inlined_call_operand.vmem [shape: f32[1,128], index: 4, kind: input, shape index: {}]
  %s5 = inlined_call_operand.hbm [shape: f32[128,896], index: 5, kind: input, shape index: {}]
  %s6 = inlined_call_operand.vmem [shape: f32[1,896], index: 6, kind: input, shape index: {}]
  %s7 = inlined_call_operand.hbm [shape: f32[8,896], index: 7, kind: output, shape index: {}]
  %s8 = sld [smem:[#allocation0]]
  $region54: #{tpu_custom_call.1} parent=0
    _
  %s10 = ssub.s32 1, %s8
  %s11 = scalar_select 0, %s10, %s8
  $region1: #{tpu_custom_call.1} parent=0
    #allocation2 [shape = 'u8[4096]{0}', space=vmem, size = 0x1000, scoped, tag = 'input window, operand 0, single buffered']
    #allocation3 [shape = 's32[1]{0}', space=sflag, size = 0x4, scoped, tag = 'scoped memory for tpu_custom_call.1']
    #allocation4 [shape = 's32[1]{0}', space=sflag, size = 0x4, scoped, tag = 'scoped memory for tpu_custom_call.1']
    #allocation5 [shape = 'u8[8192]{0}', space=vmem, size = 0x2000, scoped, tag = 'input window, operand 1, single buffered']
    #allocation6 [shape = 's32[1]{0}', space=sflag, size = 0x4, scoped, tag = 'scoped memory for tpu_custom_call.1']
    #allocation7 [shape = 'u8[65536]{0}', space=vmem, size = 0x10000, scoped, tag = 'input window, operand 3, single buffered']
    #allocation8 [shape = 'u8[458752]{0}', space=vmem, size = 0x70000, scoped, tag = 'input window, operand 5, single buffered']
    #allocation9 [shape = 's32[1]{0}', space=sflag, size = 0x4, scoped, tag = 'scoped memory for tpu_custom_call.1']
    #allocation10 [shape = 'u8[28672]{0}', space=vmem, size = 0x7000, scoped, tag = 'output window, operand 0, single buffered']
    %12 = vsyncpa [#allocation3], 0
    %13 = vsyncpa [#allocation6], 0
    %14 = vsyncpa [#allocation9], 0
    %15 = vsyncpa [#allocation4], 0
    // Predicated region
    $region2: #{tpu_custom_call.1} parent=1 // pred_check
      _
    $region3: #{tpu_custom_call.1} parent=1 // pred_check_branch
      %17 = sbr.rel (0) target = $region5
    $region4: #{tpu_custom_call.1} parent=1 // pred_region
      %s19 = ssub.s32 128, 128
      %20 = vsyncadd [#allocation3], %s19
      %s22 = sshll.u32 [#allocation2], 4
      %s23 = int_to_ptr.vmem [resolvable:$true] %s22
      %25 = dma.hbm_to_vmem [thread:$0]  %s0, 128, %s23, [#allocation3]
    $region5: #{tpu_custom_call.1} parent=1 // pred_fallthru
      _
    // Predicated region
    $region6: #{tpu_custom_call.1} parent=1 // pred_check
      _
    $region7: #{tpu_custom_call.1} parent=1 // pred_check_branch
      %27 = sbr.rel (0) target = $region9
    $region8: #{tpu_custom_call.1} parent=1 // pred_region
      %s29 = ssub.s32 256, 256
      %30 = vsyncadd [#allocation6], %s29
      %s31 = sshll.u32 [#allocation5], 4
      %s32 = int_to_ptr.vmem [resolvable:$true] %s31
      %37 = dma.hbm_to_vmem [thread:$0]  %s1, 256, %s32, [#allocation6], 128, 128, 8
    $region9: #{tpu_custom_call.1} parent=1 // pred_fallthru
      _
    // Predicated region
    $region10: #{tpu_custom_call.1} parent=1 // pred_check
      _
    $region11: #{tpu_custom_call.1} parent=1 // pred_check_branch
      %39 = sbr.rel (0) target = $region13
    $region12: #{tpu_custom_call.1} parent=1 // pred_region
      _
    $region13: #{tpu_custom_call.1} parent=1 // pred_fallthru
      _
    // Predicated region
    $region14: #{tpu_custom_call.1} parent=1 // pred_check
      _
    $region15: #{tpu_custom_call.1} parent=1 // pred_check_branch
      %41 = sbr.rel (0) target = $region17
    $region16: #{tpu_custom_call.1} parent=1 // pred_region
      %s43 = ssub.s32 2048, 2048
      %44 = vsyncadd [#allocation6], %s43
      %s45 = sshll.u32 [#allocation7], 4
      %s46 = int_to_ptr.vmem [resolvable:$true] %s45
      %51 = dma.hbm_to_vmem [thread:$0]  %s3, 2048, %s46, [#allocation6], 128, 128, 8
    $region17: #{tpu_custom_call.1} parent=1 // pred_fallthru
      _
    // Predicated region
    $region18: #{tpu_custom_call.1} parent=1 // pred_check
      _
    $region19: #{tpu_custom_call.1} parent=1 // pred_check_branch
      %53 = sbr.rel (0) target = $region21
    $region20: #{tpu_custom_call.1} parent=1 // pred_region
      _
    $region21: #{tpu_custom_call.1} parent=1 // pred_fallthru
      _
    // Predicated region
    $region22: #{tpu_custom_call.1} parent=1 // pred_check
      _
    $region23: #{tpu_custom_call.1} parent=1 // pred_check_branch
      %55 = sbr.rel (0) target = $region25
    $region24: #{tpu_custom_call.1} parent=1 // pred_region
      %s57 = ssub.s32 14336, 14336
      %58 = vsyncadd [#allocation9], %s57
      %s59 = sshll.u32 [#allocation8], 4
      %s60 = int_to_ptr.vmem [resolvable:$true] %s59
      %65 = dma.hbm_to_vmem [thread:$0]  %s5, 14336, %s60, [#allocation9], 896, 896, 56
    $region25: #{tpu_custom_call.1} parent=1 // pred_fallthru
      _
    // Predicated region
    $region26: #{tpu_custom_call.1} parent=1 // pred_check
      _
    $region27: #{tpu_custom_call.1} parent=1 // pred_check_branch
      %67 = sbr.rel (0) target = $region29
    $region28: #{tpu_custom_call.1} parent=1 // pred_region
      _
    $region29: #{tpu_custom_call.1} parent=1 // pred_fallthru
      _
    // Predicated region
    $region30: #{tpu_custom_call.1} parent=1 // pred_check
      _
    $region31: #{tpu_custom_call.1} parent=1 // pred_check_branch
      %69 = sbr.rel (0) target = $region33
    $region32: #{tpu_custom_call.1} parent=1 // pred_region
      %70 = dma.done [#allocation3], 128
    $region33: #{tpu_custom_call.1} parent=1 // pred_fallthru
      _
    // Predicated region
    $region34: #{tpu_custom_call.1} parent=1 // pred_check
      _
    $region35: #{tpu_custom_call.1} parent=1 // pred_check_branch
      %72 = sbr.rel (0) target = $region37
    $region36: #{tpu_custom_call.1} parent=1 // pred_region
      %73 = dma.done [#allocation6], 256
    $region37: #{tpu_custom_call.1} parent=1 // pred_fallthru
      _
    // Predicated region
    $region38: #{tpu_custom_call.1} parent=1 // pred_check
      _
    $region39: #{tpu_custom_call.1} parent=1 // pred_check_branch
      %75 = sbr.rel (0) target = $region41
    $region40: #{tpu_custom_call.1} parent=1 // pred_region
      %76 = dma.done [#allocation6], 2048
    $region41: #{tpu_custom_call.1} parent=1 // pred_fallthru
      _
    // Predicated region
    $region42: #{tpu_custom_call.1} parent=1 // pred_check
      _
    $region43: #{tpu_custom_call.1} parent=1 // pred_check_branch
      %78 = sbr.rel (0) target = $region45
    $region44: #{tpu_custom_call.1} parent=1 // pred_region
      %79 = dma.done [#allocation9], 14336
    $region45: #{tpu_custom_call.1} parent=1 // pred_fallthru
      _
    %v80 = vld [vmem:[#allocation2] sm:$0xff]
    %v81 = vld [vmem:[#allocation5] sm:$0xff]
    %v82 = vld [vmem:[#allocation5 + $0x8] sm:$0xff]
    %v83 = vld [vmem:[%s2] sm:$0x1]
    %v85 = vlaneseq
    %v86 = vshrl.u32 %v85, 7
    %v87 = vsub.s32 0, %v86
    %v88 = vrot.slane %v83, %v87
    %vm90 = vcmask 130048
    %v92 = vsel %vm90, %v80, 0
    %94 = vmatprep.subr.mxu0 0.0
    %95 = vmatpush1.msra.mxu0 0.0
    %96 = vmatprep.subr.mxu0 0.0
    %97 = vmatpush1.msra.mxu0 0.0
    %98 = vmatprep.subr.mxu0 0.0
    %99 = vmatpush1.msra.mxu0 0.0
    %100 = vmatprep.subr.mxu0 0.0
    %101 = vmatpush1.msra.mxu0 0.0
    %102 = vmatprep.subr.mxu0 0.0
    %103 = vmatpush1.msra.mxu0 0.0
    %104 = vmatprep.subr.mxu0 0.0
    %105 = vmatpush1.msra.mxu0 0.0
    %106 = vmatprep.subr.mxu0 0.0
    %107 = vmatpush1.msra.mxu0 0.0
    %108 = vmatprep.subr.mxu0 0.0
    %109 = vmatpush1.msra.mxu0 0.0
    %110 = vmatprep.subr.mxu0 0.0
    %111 = vmatpush1.msra.mxu0 0.0
    %112 = vmatprep.subr.mxu0 0.0
    %113 = vmatpush1.msra.mxu0 0.0
    %114 = vmatprep.subr.mxu0 0.0
    %115 = vmatpush1.msra.mxu0 0.0
    %116 = vmatprep.subr.mxu0 0.0
    %117 = vmatpush1.msra.mxu0 0.0
    %118 = vmatprep.subr.mxu0 0.0
    %119 = vmatpush1.msra.mxu0 0.0
    %120 = vmatprep.subr.mxu0 0.0
    %121 = vmatpush1.msra.mxu0 0.0
    %122 = vmatprep.subr.mxu0 0.0
    %123 = vmatpush1.msra.mxu0 %v82
    %124 = vmatprep.subr.mxu0 0.0
    %125 = vmatpush1.msra.mxu0 %v81
    %126 = vmatprep.subr.mxu0 0.0
    %127 = vmatpush2.msra.mxu0 0.0
    %128 = vmatprep.subr.mxu0 0.0
    %129 = vmatpush2.msra.mxu0 0.0
    %130 = vmatprep.subr.mxu0 0.0
    %131 = vmatpush2.msra.mxu0 0.0
    %132 = vmatprep.subr.mxu0 0.0
    %133 = vmatpush2.msra.mxu0 0.0
    %134 = vmatprep.subr.mxu0 0.0
    %135 = vmatpush2.msra.mxu0 0.0
    %136 = vmatprep.subr.mxu0 0.0
    %137 = vmatpush2.msra.mxu0 0.0
    %138 = vmatprep.subr.mxu0 0.0
    %139 = vmatpush2.msra.mxu0 0.0
    %140 = vmatprep.subr.mxu0 0.0
    %141 = vmatpush2.msra.mxu0 0.0
    %142 = vmatprep.subr.mxu0 0.0
    %143 = vmatpush2.msra.mxu0 0.0
    %144 = vmatprep.subr.mxu0 0.0
    %145 = vmatpush2.msra.mxu0 0.0
    %146 = vmatprep.subr.mxu0 0.0
    %147 = vmatpush2.msra.mxu0 0.0
    %148 = vmatprep.subr.mxu0 0.0
    %149 = vmatpush2.msra.mxu0 0.0
    %150 = vmatprep.subr.mxu0 0.0
    %151 = vmatpush2.msra.mxu0 0.0
    %152 = vmatprep.subr.mxu0 0.0
    %153 = vmatpush2.msra.mxu0 0.0
    %154 = vmatprep.subr.mxu0 0.0
    %155 = vmatpush2.msra.mxu0 0.0
    %156 = vmatprep.subr.mxu0 0.0
    %157 = vmatpush2.msra.mxu0 0.0
    %158 = vmatprep.mubr.f32.mxu0 0.0
    %159 = vmatmul.mubr.f32.gmra.mxu0 %v92
    %v160 = vpop.f32.mrf.mxu0
    %v161 = vadd.f32 %v88, %v160
    %v162 = vpop.f32.mrf.mxu0
    %163 = vdwg.mxu0
    %v164 = vmax.f32 %v161, 0.0
    %v165 = vld [vmem:[#allocation7] sm:$0xff]
    %v166 = vld [vmem:[#allocation7 + $0x8] sm:$0xff]
    %v167 = vld [vmem:[#allocation7 + $0x10] sm:$0xff]
    %v168 = vld [vmem:[#allocation7 + $0x18] sm:$0xff]
    %v169 = vld [vmem:[#allocation7 + $0x20] sm:$0xff]
    %v170 = vld [vmem:[#allocation7 + $0x28] sm:$0xff]
    %v171 = vld [vmem:[#allocation7 + $0x30] sm:$0xff]
    %v172 = vld [vmem:[#allocation7 + $0x38] sm:$0xff]
    %v173 = vld [vmem:[#allocation7 + $0x40] sm:$0xff]
    %v174 = vld [vmem:[#allocation7 + $0x48] sm:$0xff]
    %v175 = vld [vmem:[#allocation7 + $0x50] sm:$0xff]
    %v176 = vld [vmem:[#allocation7 + $0x58] sm:$0xff]
    %v177 = vld [vmem:[#allocation7 + $0x60] sm:$0xff]
    %v178 = vld [vmem:[#allocation7 + $0x68] sm:$0xff]
    %v179 = vld [vmem:[#allocation7 + $0x70] sm:$0xff]
    %v180 = vld [vmem:[#allocation7 + $0x78] sm:$0xff]
    %v181 = vld [vmem:[%s4] sm:$0x1]
    %v183 = vlaneseq
    %v184 = vshrl.u32 %v183, 7
    %v185 = vsub.s32 0, %v184
    %v186 = vrot.slane %v181, %v185
    %188 = vmatprep.subr.mxu0 0.0
    %189 = vmatpush1.msra.mxu0 %v180
    %190 = vmatprep.subr.mxu0 0.0
    %191 = vmatpush1.msra.mxu0 %v179
    %192 = vmatprep.subr.mxu0 0.0
    %193 = vmatpush1.msra.mxu0 %v178
    %194 = vmatprep.subr.mxu0 0.0
    %195 = vmatpush1.msra.mxu0 %v177
    %196 = vmatprep.subr.mxu0 0.0
    %197 = vmatpush1.msra.mxu0 %v176
    %198 = vmatprep.subr.mxu0 0.0
    %199 = vmatpush1.msra.mxu0 %v175
    %200 = vmatprep.subr.mxu0 0.0
    %201 = vmatpush1.msra.mxu0 %v174
    %202 = vmatprep.subr.mxu0 0.0
    %203 = vmatpush1.msra.mxu0 %v173
    %204 = vmatprep.subr.mxu0 0.0
    %205 = vmatpush1.msra.mxu0 %v172
    %206 = vmatprep.subr.mxu0 0.0
    %207 = vmatpush1.msra.mxu0 %v171
    %208 = vmatprep.subr.mxu0 0.0
    %209 = vmatpush1.msra.mxu0 %v170
    %210 = vmatprep.subr.mxu0 0.0
    %211 = vmatpush1.msra.mxu0 %v169
    %212 = vmatprep.subr.mxu0 0.0
    %213 = vmatpush1.msra.mxu0 %v168
    %214 = vmatprep.subr.mxu0 0.0
    %215 = vmatpush1.msra.mxu0 %v167
    %216 = vmatprep.subr.mxu0 0.0
    %217 = vmatpush1.msra.mxu0 %v166
    %218 = vmatprep.subr.mxu0 0.0
    %219 = vmatpush1.msra.mxu0 %v165
    %220 = vmatprep.subr.mxu0 0.0
    %221 = vmatpush2.msra.mxu0 0.0
    %222 = vmatprep.subr.mxu0 0.0
    %223 = vmatpush2.msra.mxu0 0.0
    %224 = vmatprep.subr.mxu0 0.0
    %225 = vmatpush2.msra.mxu0 0.0
    %226 = vmatprep.subr.mxu0 0.0
    %227 = vmatpush2.msra.mxu0 0.0
    %228 = vmatprep.subr.mxu0 0.0
    %229 = vmatpush2.msra.mxu0 0.0
    %230 = vmatprep.subr.mxu0 0.0
    %231 = vmatpush2.msra.mxu0 0.0
    %232 = vmatprep.subr.mxu0 0.0
    %233 = vmatpush2.msra.mxu0 0.0
    %234 = vmatprep.subr.mxu0 0.0
    %235 = vmatpush2.msra.mxu0 0.0
    %236 = vmatprep.subr.mxu0 0.0
    %237 = vmatpush2.msra.mxu0 0.0
    %238 = vmatprep.subr.mxu0 0.0
    %239 = vmatpush2.msra.mxu0 0.0
    %240 = vmatprep.subr.mxu0 0.0
    %241 = vmatpush2.msra.mxu0 0.0
    %242 = vmatprep.subr.mxu0 0.0
    %243 = vmatpush2.msra.mxu0 0.0
    %244 = vmatprep.subr.mxu0 0.0
    %245 = vmatpush2.msra.mxu0 0.0
    %246 = vmatprep.subr.mxu0 0.0
    %247 = vmatpush2.msra.mxu0 0.0
    %248 = vmatprep.subr.mxu0 0.0
    %249 = vmatpush2.msra.mxu0 0.0
    %250 = vmatprep.subr.mxu0 0.0
    %251 = vmatpush2.msra.mxu0 0.0
    %252 = vmatprep.mubr.f32.mxu0 0.0
    %253 = vmatmul.mubr.f32.gmra.mxu0 %v164
    %v254 = vpop.f32.mrf.mxu0
    %v255 = vadd.f32 %v186, %v254
    %v256 = vpop.f32.mrf.mxu0
    %257 = vdwg.mxu0
    %v258 = vmax.f32 %v255, 0.0
    %v259 = vld [vmem:[#allocation8] sm:$0xff]
    %v260 = vld [vmem:[#allocation8 + $0x8] sm:$0xff]
    %v261 = vld [vmem:[#allocation8 + $0x10] sm:$0xff]
    %v262 = vld [vmem:[#allocation8 + $0x18] sm:$0xff]
    %v263 = vld [vmem:[#allocation8 + $0x20] sm:$0xff]
    %v264 = vld [vmem:[#allocation8 + $0x28] sm:$0xff]
    %v265 = vld [vmem:[#allocation8 + $0x30] sm:$0xff]
    %v266 = vld [vmem:[#allocation8 + $0x38] sm:$0xff]
    %v267 = vld [vmem:[#allocation8 + $0x40] sm:$0xff]
    %v268 = vld [vmem:[#allocation8 + $0x48] sm:$0xff]
    %v269 = vld [vmem:[#allocation8 + $0x50] sm:$0xff]
    %v270 = vld [vmem:[#allocation8 + $0x58] sm:$0xff]
    %v271 = vld [vmem:[#allocation8 + $0x60] sm:$0xff]
    %v272 = vld [vmem:[#allocation8 + $0x68] sm:$0xff]
    %v273 = vld [vmem:[#allocation8 + $0x70] sm:$0xff]
    %v274 = vld [vmem:[#allocation8 + $0x78] sm:$0xff]
    %v275 = vld [vmem:[#allocation8 + $0x80] sm:$0xff]
    %v276 = vld [vmem:[#allocation8 + $0x88] sm:$0xff]
    %v277 = vld [vmem:[#allocation8 + $0x90] sm:$0xff]
    %v278 = vld [vmem:[#allocation8 + $0x98] sm:$0xff]
    %v279 = vld [vmem:[#allocation8 + $0xa0] sm:$0xff]
    %v280 = vld [vmem:[#allocation8 + $0xa8] sm:$0xff]
    %v281 = vld [vmem:[#allocation8 + $0xb0] sm:$0xff]
    %v282 = vld [vmem:[#allocation8 + $0xb8] sm:$0xff]
    %v283 = vld [vmem:[#allocation8 + $0xc0] sm:$0xff]
    %v284 = vld [vmem:[#allocation8 + $0xc8] sm:$0xff]
    %v285 = vld [vmem:[#allocation8 + $0xd0] sm:$0xff]
    %v286 = vld [vmem:[#allocation8 + $0xd8] sm:$0xff]
    %v287 = vld [vmem:[#allocation8 + $0xe0] sm:$0xff]
    %v288 = vld [vmem:[#allocation8 + $0xe8] sm:$0xff]
    %v289 = vld [vmem:[#allocation8 + $0xf0] sm:$0xff]
    %v290 = vld [vmem:[#allocation8 + $0xf8] sm:$0xff]
    %v291 = vld [vmem:[#allocation8 + $0x100] sm:$0xff]
    %v292 = vld [vmem:[#allocation8 + $0x108] sm:$0xff]
    %v293 = vld [vmem:[#allocation8 + $0x110] sm:$0xff]
    %v294 = vld [vmem:[#allocation8 + $0x118] sm:$0xff]
    %v295 = vld [vmem:[#allocation8 + $0x120] sm:$0xff]
    %v296 = vld [vmem:[#allocation8 + $0x128] sm:$0xff]
    %v297 = vld [vmem:[#allocation8 + $0x130] sm:$0xff]
    %v298 = vld [vmem:[#allocation8 + $0x138] sm:$0xff]
    %v299 = vld [vmem:[#allocation8 + $0x140] sm:$0xff]
    %v300 = vld [vmem:[#allocation8 + $0x148] sm:$0xff]
    %v301 = vld [vmem:[#allocation8 + $0x150] sm:$0xff]
    %v302 = vld [vmem:[#allocation8 + $0x158] sm:$0xff]
    %v303 = vld [vmem:[#allocation8 + $0x160] sm:$0xff]
    %v304 = vld [vmem:[#allocation8 + $0x168] sm:$0xff]
    %v305 = vld [vmem:[#allocation8 + $0x170] sm:$0xff]
    %v306 = vld [vmem:[#allocation8 + $0x178] sm:$0xff]
    %v307 = vld [vmem:[#allocation8 + $0x180] sm:$0xff]
    %v308 = vld [vmem:[#allocation8 + $0x188] sm:$0xff]
    %v309 = vld [vmem:[#allocation8 + $0x190] sm:$0xff]
    %v310 = vld [vmem:[#allocation8 + $0x198] sm:$0xff]
    %v311 = vld [vmem:[#allocation8 + $0x1a0] sm:$0xff]
    %v312 = vld [vmem:[#allocation8 + $0x1a8] sm:$0xff]
    %v313 = vld [vmem:[#allocation8 + $0x1b0] sm:$0xff]
    %v314 = vld [vmem:[#allocation8 + $0x1b8] sm:$0xff]
    %v315 = vld [vmem:[#allocation8 + $0x1c0] sm:$0xff]
    %v316 = vld [vmem:[#allocation8 + $0x1c8] sm:$0xff]
    %v317 = vld [vmem:[#allocation8 + $0x1d0] sm:$0xff]
    %v318 = vld [vmem:[#allocation8 + $0x1d8] sm:$0xff]
    %v319 = vld [vmem:[#allocation8 + $0x1e0] sm:$0xff]
    %v320 = vld [vmem:[#allocation8 + $0x1e8] sm:$0xff]
    %v321 = vld [vmem:[#allocation8 + $0x1f0] sm:$0xff]
    %v322 = vld [vmem:[#allocation8 + $0x1f8] sm:$0xff]
    %v323 = vld [vmem:[#allocation8 + $0x200] sm:$0xff]
    %v324 = vld [vmem:[#allocation8 + $0x208] sm:$0xff]
    %v325 = vld [vmem:[#allocation8 + $0x210] sm:$0xff]
    %v326 = vld [vmem:[#allocation8 + $0x218] sm:$0xff]
    %v327 = vld [vmem:[#allocation8 + $0x220] sm:$0xff]
    %v328 = vld [vmem:[#allocation8 + $0x228] sm:$0xff]
    %v329 = vld [vmem:[#allocation8 + $0x230] sm:$0xff]
    %v330 = vld [vmem:[#allocation8 + $0x238] sm:$0xff]
    %v331 = vld [vmem:[#allocation8 + $0x240] sm:$0xff]
    %v332 = vld [vmem:[#allocation8 + $0x248] sm:$0xff]
    %v333 = vld [vmem:[#allocation8 + $0x250] sm:$0xff]
    %v334 = vld [vmem:[#allocation8 + $0x258] sm:$0xff]
    %v335 = vld [vmem:[#allocation8 + $0x260] sm:$0xff]
    %v336 = vld [vmem:[#allocation8 + $0x268] sm:$0xff]
    %v337 = vld [vmem:[#allocation8 + $0x270] sm:$0xff]
    %v338 = vld [vmem:[#allocation8 + $0x278] sm:$0xff]
    %v339 = vld [vmem:[#allocation8 + $0x280] sm:$0xff]
    %v340 = vld [vmem:[#allocation8 + $0x288] sm:$0xff]
    %v341 = vld [vmem:[#allocation8 + $0x290] sm:$0xff]
    %v342 = vld [vmem:[#allocation8 + $0x298] sm:$0xff]
    %v343 = vld [vmem:[#allocation8 + $0x2a0] sm:$0xff]
    %v344 = vld [vmem:[#allocation8 + $0x2a8] sm:$0xff]
    %v345 = vld [vmem:[#allocation8 + $0x2b0] sm:$0xff]
    %v346 = vld [vmem:[#allocation8 + $0x2b8] sm:$0xff]
    %v347 = vld [vmem:[#allocation8 + $0x2c0] sm:$0xff]
    %v348 = vld [vmem:[#allocation8 + $0x2c8] sm:$0xff]
    %v349 = vld [vmem:[#allocation8 + $0x2d0] sm:$0xff]
    %v350 = vld [vmem:[#allocation8 + $0x2d8] sm:$0xff]
    %v351 = vld [vmem:[#allocation8 + $0x2e0] sm:$0xff]
    %v352 = vld [vmem:[#allocation8 + $0x2e8] sm:$0xff]
    %v353 = vld [vmem:[#allocation8 + $0x2f0] sm:$0xff]
    %v354 = vld [vmem:[#allocation8 + $0x2f8] sm:$0xff]
    %v355 = vld [vmem:[#allocation8 + $0x300] sm:$0xff]
    %v356 = vld [vmem:[#allocation8 + $0x308] sm:$0xff]
    %v357 = vld [vmem:[#allocation8 + $0x310] sm:$0xff]
    %v358 = vld [vmem:[#allocation8 + $0x318] sm:$0xff]
    %v359 = vld [vmem:[#allocation8 + $0x320] sm:$0xff]
    %v360 = vld [vmem:[#allocation8 + $0x328] sm:$0xff]
    %v361 = vld [vmem:[#allocation8 + $0x330] sm:$0xff]
    %v362 = vld [vmem:[#allocation8 + $0x338] sm:$0xff]
    %v363 = vld [vmem:[#allocation8 + $0x340] sm:$0xff]
    %v364 = vld [vmem:[#allocation8 + $0x348] sm:$0xff]
    %v365 = vld [vmem:[#allocation8 + $0x350] sm:$0xff]
    %v366 = vld [vmem:[#allocation8 + $0x358] sm:$0xff]
    %v367 = vld [vmem:[#allocation8 + $0x360] sm:$0xff]
    %v368 = vld [vmem:[#allocation8 + $0x368] sm:$0xff]
    %v369 = vld [vmem:[#allocation8 + $0x370] sm:$0xff]
    %v370 = vld [vmem:[#allocation8 + $0x378] sm:$0xff]
    %v371 = vld [vmem:[%s6] sm:$0xff]
    %v373 = vlaneseq
    %v374 = vshrl.u32 %v373, 7
    %v375 = vsub.s32 0, %v374
    %v376 = vrot.slane %v371, %v375
    %v377 = vlaneseq
    %v378 = vshrl.u32 %v377, 7
    %v379 = vsub.s32 1, %v378
    %v380 = vrot.slane %v371, %v379
    %v381 = vlaneseq
    %v382 = vshrl.u32 %v381, 7
    %v383 = vsub.s32 2, %v382
    %v384 = vrot.slane %v371, %v383
    %v385 = vlaneseq
    %v386 = vshrl.u32 %v385, 7
    %v387 = vsub.s32 3, %v386
    %v388 = vrot.slane %v371, %v387
    %v389 = vlaneseq
    %v390 = vshrl.u32 %v389, 7
    %v391 = vsub.s32 4, %v390
    %v392 = vrot.slane %v371, %v391
    %v393 = vlaneseq
    %v394 = vshrl.u32 %v393, 7
    %v395 = vsub.s32 5, %v394
    %v396 = vrot.slane %v371, %v395
    %v397 = vlaneseq
    %v398 = vshrl.u32 %v397, 7
    %v399 = vsub.s32 6, %v398
    %v400 = vrot.slane %v371, %v399
    %408 = vmatprep.subr.mxu0 %v365
    %409 = vmatpush1.msra.mxu0 %v364
    %410 = vmatprep.subr.mxu0 %v358
    %411 = vmatpush1.msra.mxu0 %v357
    %412 = vmatprep.subr.mxu0 %v351
    %413 = vmatpush1.msra.mxu0 %v350
    %414 = vmatprep.subr.mxu0 %v344
    %415 = vmatpush1.msra.mxu0 %v343
    %416 = vmatprep.subr.mxu0 %v337
    %417 = vmatpush1.msra.mxu0 %v336
    %418 = vmatprep.subr.mxu0 %v330
    %419 = vmatpush1.msra.mxu0 %v329
    %420 = vmatprep.subr.mxu0 %v323
    %421 = vmatpush1.msra.mxu0 %v322
    %422 = vmatprep.subr.mxu0 %v316
    %423 = vmatpush1.msra.mxu0 %v315
    %424 = vmatprep.subr.mxu0 %v309
    %425 = vmatpush1.msra.mxu0 %v308
    %426 = vmatprep.subr.mxu0 %v302
    %427 = vmatpush1.msra.mxu0 %v301
    %428 = vmatprep.subr.mxu0 %v295
    %429 = vmatpush1.msra.mxu0 %v294
    %430 = vmatprep.subr.mxu0 %v288
    %431 = vmatpush1.msra.mxu0 %v287
    %432 = vmatprep.subr.mxu0 %v281
    %433 = vmatpush1.msra.mxu0 %v280
    %434 = vmatprep.subr.mxu0 %v274
    %435 = vmatpush1.msra.mxu0 %v273
    %436 = vmatprep.subr.mxu0 %v267
    %437 = vmatpush1.msra.mxu0 %v266
    %438 = vmatprep.subr.mxu0 %v260
    %439 = vmatpush1.msra.mxu0 %v259
    %440 = vmatprep.subr.mxu0 0.0
    %441 = vmatpush2.msra.mxu0 0.0
    %442 = vmatprep.subr.mxu0 0.0
    %443 = vmatpush2.msra.mxu0 0.0
    %444 = vmatprep.subr.mxu0 0.0
    %445 = vmatpush2.msra.mxu0 0.0
    %446 = vmatprep.subr.mxu0 0.0
    %447 = vmatpush2.msra.mxu0 0.0
    %448 = vmatprep.subr.mxu0 0.0
    %449 = vmatpush2.msra.mxu0 0.0
    %450 = vmatprep.subr.mxu0 0.0
    %451 = vmatpush2.msra.mxu0 0.0
    %452 = vmatprep.subr.mxu0 0.0
    %453 = vmatpush2.msra.mxu0 0.0
    %454 = vmatprep.subr.mxu0 0.0
    %455 = vmatpush2.msra.mxu0 0.0
    %456 = vmatprep.subr.mxu0 0.0
    %457 = vmatpush2.msra.mxu0 0.0
    %458 = vmatprep.subr.mxu0 0.0
    %459 = vmatpush2.msra.mxu0 0.0
    %460 = vmatprep.subr.mxu0 0.0
    %461 = vmatpush2.msra.mxu0 0.0
    %462 = vmatprep.subr.mxu0 0.0
    %463 = vmatpush2.msra.mxu0 0.0
    %464 = vmatprep.subr.mxu0 0.0
    %465 = vmatpush2.msra.mxu0 0.0
    %466 = vmatprep.subr.mxu0 0.0
    %467 = vmatpush2.msra.mxu0 0.0
    %468 = vmatprep.subr.mxu0 0.0
    %469 = vmatpush2.msra.mxu0 0.0
    %470 = vmatprep.subr.mxu0 0.0
    %471 = vmatpush2.msra.mxu0 0.0
    %472 = vmatprep.mubr.f32.mxu0 0.0
    %473 = vmatmul.mubr.f32.gmra.mxu0 %v258
    %v474 = vpop.f32.mrf.mxu0
    %v475 = vadd.f32 %v376, %v474
    %v476 = vpop.f32.mrf.mxu0
    %v477 = vadd.f32 %v380, %v476
    %478 = vdwg.mxu0
    %479 = vmatprep.subr.mxu0 %v367
    %480 = vmatpush1.msra.mxu0 %v366
    %481 = vmatprep.subr.mxu0 %v360
    %482 = vmatpush1.msra.mxu0 %v359
    %483 = vmatprep.subr.mxu0 %v353
    %484 = vmatpush1.msra.mxu0 %v352
    %485 = vmatprep.subr.mxu0 %v346
    %486 = vmatpush1.msra.mxu0 %v345
    %487 = vmatprep.subr.mxu0 %v339
    %488 = vmatpush1.msra.mxu0 %v338
    %489 = vmatprep.subr.mxu0 %v332
    %490 = vmatpush1.msra.mxu0 %v331
    %491 = vmatprep.subr.mxu0 %v325
    %492 = vmatpush1.msra.mxu0 %v324
    %493 = vmatprep.subr.mxu0 %v318
    %494 = vmatpush1.msra.mxu0 %v317
    %495 = vmatprep.subr.mxu0 %v311
    %496 = vmatpush1.msra.mxu0 %v310
    %497 = vmatprep.subr.mxu0 %v304
    %498 = vmatpush1.msra.mxu0 %v303
    %499 = vmatprep.subr.mxu0 %v297
    %500 = vmatpush1.msra.mxu0 %v296
    %501 = vmatprep.subr.mxu0 %v290
    %502 = vmatpush1.msra.mxu0 %v289
    %503 = vmatprep.subr.mxu0 %v283
    %504 = vmatpush1.msra.mxu0 %v282
    %505 = vmatprep.subr.mxu0 %v276
    %506 = vmatpush1.msra.mxu0 %v275
    %507 = vmatprep.subr.mxu0 %v269
    %508 = vmatpush1.msra.mxu0 %v268
    %509 = vmatprep.subr.mxu0 %v262
    %510 = vmatpush1.msra.mxu0 %v261
    %511 = vmatprep.subr.mxu0 0.0
    %512 = vmatpush2.msra.mxu0 0.0
    %513 = vmatprep.subr.mxu0 0.0
    %514 = vmatpush2.msra.mxu0 0.0
    %515 = vmatprep.subr.mxu0 0.0
    %516 = vmatpush2.msra.mxu0 0.0
    %517 = vmatprep.subr.mxu0 0.0
    %518 = vmatpush2.msra.mxu0 0.0
    %519 = vmatprep.subr.mxu0 0.0
    %520 = vmatpush2.msra.mxu0 0.0
    %521 = vmatprep.subr.mxu0 0.0
    %522 = vmatpush2.msra.mxu0 0.0
    %523 = vmatprep.subr.mxu0 0.0
    %524 = vmatpush2.msra.mxu0 0.0
    %525 = vmatprep.subr.mxu0 0.0
    %526 = vmatpush2.msra.mxu0 0.0
    %527 = vmatprep.subr.mxu0 0.0
    %528 = vmatpush2.msra.mxu0 0.0
    %529 = vmatprep.subr.mxu0 0.0
    %530 = vmatpush2.msra.mxu0 0.0
    %531 = vmatprep.subr.mxu0 0.0
    %532 = vmatpush2.msra.mxu0 0.0
    %533 = vmatprep.subr.mxu0 0.0
    %534 = vmatpush2.msra.mxu0 0.0
    %535 = vmatprep.subr.mxu0 0.0
    %536 = vmatpush2.msra.mxu0 0.0
    %537 = vmatprep.subr.mxu0 0.0
    %538 = vmatpush2.msra.mxu0 0.0
    %539 = vmatprep.subr.mxu0 0.0
    %540 = vmatpush2.msra.mxu0 0.0
    %541 = vmatprep.subr.mxu0 0.0
    %542 = vmatpush2.msra.mxu0 0.0
    %543 = vmatprep.mubr.f32.mxu0 0.0
    %544 = vmatmul.mubr.f32.gmra.mxu0 %v258
    %v545 = vpop.f32.mrf.mxu0
    %v546 = vadd.f32 %v384, %v545
    %v547 = vpop.f32.mrf.mxu0
    %v548 = vadd.f32 %v388, %v547
    %549 = vdwg.mxu0
    %550 = vmatprep.subr.mxu0 %v369
    %551 = vmatpush1.msra.mxu0 %v368
    %552 = vmatprep.subr.mxu0 %v362
    %553 = vmatpush1.msra.mxu0 %v361
    %554 = vmatprep.subr.mxu0 %v355
    %555 = vmatpush1.msra.mxu0 %v354
    %556 = vmatprep.subr.mxu0 %v348
    %557 = vmatpush1.msra.mxu0 %v347
    %558 = vmatprep.subr.mxu0 %v341
    %559 = vmatpush1.msra.mxu0 %v340
    %560 = vmatprep.subr.mxu0 %v334
    %561 = vmatpush1.msra.mxu0 %v333
    %562 = vmatprep.subr.mxu0 %v327
    %563 = vmatpush1.msra.mxu0 %v326
    %564 = vmatprep.subr.mxu0 %v320
    %565 = vmatpush1.msra.mxu0 %v319
    %566 = vmatprep.subr.mxu0 %v313
    %567 = vmatpush1.msra.mxu0 %v312
    %568 = vmatprep.subr.mxu0 %v306
    %569 = vmatpush1.msra.mxu0 %v305
    %570 = vmatprep.subr.mxu0 %v299
    %571 = vmatpush1.msra.mxu0 %v298
    %572 = vmatprep.subr.mxu0 %v292
    %573 = vmatpush1.msra.mxu0 %v291
    %574 = vmatprep.subr.mxu0 %v285
    %575 = vmatpush1.msra.mxu0 %v284
    %576 = vmatprep.subr.mxu0 %v278
    %577 = vmatpush1.msra.mxu0 %v277
    %578 = vmatprep.subr.mxu0 %v271
    %579 = vmatpush1.msra.mxu0 %v270
    %580 = vmatprep.subr.mxu0 %v264
    %581 = vmatpush1.msra.mxu0 %v263
    %582 = vmatprep.subr.mxu0 0.0
    %583 = vmatpush2.msra.mxu0 0.0
    %584 = vmatprep.subr.mxu0 0.0
    %585 = vmatpush2.msra.mxu0 0.0
    %586 = vmatprep.subr.mxu0 0.0
    %587 = vmatpush2.msra.mxu0 0.0
    %588 = vmatprep.subr.mxu0 0.0
    %589 = vmatpush2.msra.mxu0 0.0
    %590 = vmatprep.subr.mxu0 0.0
    %591 = vmatpush2.msra.mxu0 0.0
    %592 = vmatprep.subr.mxu0 0.0
    %593 = vmatpush2.msra.mxu0 0.0
    %594 = vmatprep.subr.mxu0 0.0
    %595 = vmatpush2.msra.mxu0 0.0
    %596 = vmatprep.subr.mxu0 0.0
    %597 = vmatpush2.msra.mxu0 0.0
    %598 = vmatprep.subr.mxu0 0.0
    %599 = vmatpush2.msra.mxu0 0.0
    %600 = vmatprep.subr.mxu0 0.0
    %601 = vmatpush2.msra.mxu0 0.0
    %602 = vmatprep.subr.mxu0 0.0
    %603 = vmatpush2.msra.mxu0 0.0
    %604 = vmatprep.subr.mxu0 0.0
    %605 = vmatpush2.msra.mxu0 0.0
    %606 = vmatprep.subr.mxu0 0.0
    %607 = vmatpush2.msra.mxu0 0.0
    %608 = vmatprep.subr.mxu0 0.0
    %609 = vmatpush2.msra.mxu0 0.0
    %610 = vmatprep.subr.mxu0 0.0
    %611 = vmatpush2.msra.mxu0 0.0
    %612 = vmatprep.subr.mxu0 0.0
    %613 = vmatpush2.msra.mxu0 0.0
    %614 = vmatprep.mubr.f32.mxu0 0.0
    %615 = vmatmul.mubr.f32.gmra.mxu0 %v258
    %v616 = vpop.f32.mrf.mxu0
    %v617 = vadd.f32 %v392, %v616
    %v618 = vpop.f32.mrf.mxu0
    %v619 = vadd.f32 %v396, %v618
    %620 = vdwg.mxu0
    %621 = vmatprep.subr.mxu0 0.0
    %622 = vmatpush1.msra.mxu0 %v370
    %623 = vmatprep.subr.mxu0 0.0
    %624 = vmatpush1.msra.mxu0 %v363
    %625 = vmatprep.subr.mxu0 0.0
    %626 = vmatpush1.msra.mxu0 %v356
    %627 = vmatprep.subr.mxu0 0.0
    %628 = vmatpush1.msra.mxu0 %v349
    %629 = vmatprep.subr.mxu0 0.0
    %630 = vmatpush1.msra.mxu0 %v342
    %631 = vmatprep.subr.mxu0 0.0
    %632 = vmatpush1.msra.mxu0 %v335
    %633 = vmatprep.subr.mxu0 0.0
    %634 = vmatpush1.msra.mxu0 %v328
    %635 = vmatprep.subr.mxu0 0.0
    %636 = vmatpush1.msra.mxu0 %v321
    %637 = vmatprep.subr.mxu0 0.0
    %638 = vmatpush1.msra.mxu0 %v314
    %639 = vmatprep.subr.mxu0 0.0
    %640 = vmatpush1.msra.mxu0 %v307
    %641 = vmatprep.subr.mxu0 0.0
    %642 = vmatpush1.msra.mxu0 %v300
    %643 = vmatprep.subr.mxu0 0.0
    %644 = vmatpush1.msra.mxu0 %v293
    %645 = vmatprep.subr.mxu0 0.0
    %646 = vmatpush1.msra.mxu0 %v286
    %647 = vmatprep.subr.mxu0 0.0
    %648 = vmatpush1.msra.mxu0 %v279
    %649 = vmatprep.subr.mxu0 0.0
    %650 = vmatpush1.msra.mxu0 %v272
    %651 = vmatprep.subr.mxu0 0.0
    %652 = vmatpush1.msra.mxu0 %v265
    %653 = vmatprep.subr.mxu0 0.0
    %654 = vmatpush2.msra.mxu0 0.0
    %655 = vmatprep.subr.mxu0 0.0
    %656 = vmatpush2.msra.mxu0 0.0
    %657 = vmatprep.subr.mxu0 0.0
    %658 = vmatpush2.msra.mxu0 0.0
    %659 = vmatprep.subr.mxu0 0.0
    %660 = vmatpush2.msra.mxu0 0.0
    %661 = vmatprep.subr.mxu0 0.0
    %662 = vmatpush2.msra.mxu0 0.0
    %663 = vmatprep.subr.mxu0 0.0
    %664 = vmatpush2.msra.mxu0 0.0
    %665 = vmatprep.subr.mxu0 0.0
    %666 = vmatpush2.msra.mxu0 0.0
    %667 = vmatprep.subr.mxu0 0.0
    %668 = vmatpush2.msra.mxu0 0.0
    %669 = vmatprep.subr.mxu0 0.0
    %670 = vmatpush2.msra.mxu0 0.0
    %671 = vmatprep.subr.mxu0 0.0
    %672 = vmatpush2.msra.mxu0 0.0
    %673 = vmatprep.subr.mxu0 0.0
    %674 = vmatpush2.msra.mxu0 0.0
    %675 = vmatprep.subr.mxu0 0.0
    %676 = vmatpush2.msra.mxu0 0.0
    %677 = vmatprep.subr.mxu0 0.0
    %678 = vmatpush2.msra.mxu0 0.0
    %679 = vmatprep.subr.mxu0 0.0
    %680 = vmatpush2.msra.mxu0 0.0
    %681 = vmatprep.subr.mxu0 0.0
    %682 = vmatpush2.msra.mxu0 0.0
    %683 = vmatprep.subr.mxu0 0.0
    %684 = vmatpush2.msra.mxu0 0.0
    %685 = vmatprep.mubr.f32.mxu0 0.0
    %686 = vmatmul.mubr.f32.gmra.mxu0 %v258
    %v687 = vpop.f32.mrf.mxu0
    %v688 = vadd.f32 %v400, %v687
    %v689 = vpop.f32.mrf.mxu0
    %690 = vdwg.mxu0
    %v691 = vxor.u32 %v475, 2147483648
    %v692 = vxor.u32 %v477, 2147483648
    %v693 = vxor.u32 %v546, 2147483648
    %v694 = vxor.u32 %v548, 2147483648
    %v695 = vxor.u32 %v617, 2147483648
    %v696 = vxor.u32 %v619, 2147483648
    %v697 = vxor.u32 %v688, 2147483648
    %v698 = vmul.f32 %v691, 1.442695
    %v699 = vpow.pop %v698
    %v700 = vmul.f32 %v692, 1.442695
    %v701 = vpow.pop %v700
    %v702 = vmul.f32 %v693, 1.442695
    %v703 = vpow.pop %v702
    %v704 = vmul.f32 %v694, 1.442695
    %v705 = vpow.pop %v704
    %v706 = vmul.f32 %v695, 1.442695
    %v707 = vpow.pop %v706
    %v708 = vmul.f32 %v696, 1.442695
    %v709 = vpow.pop %v708
    %v710 = vmul.f32 %v697, 1.442695
    %v711 = vpow.pop %v710
    %v712 = vadd.f32 %v699, 1.0
    %v713 = vadd.f32 %v701, 1.0
    %v714 = vadd.f32 %v703, 1.0
    %v715 = vadd.f32 %v705, 1.0
    %v716 = vadd.f32 %v707, 1.0
    %v717 = vadd.f32 %v709, 1.0
    %v718 = vadd.f32 %v711, 1.0
    %v719 = vrcp.pop %v712
    %v720 = vmul.f32 1.0, %v719
    %v721 = vrcp.pop %v713
    %v722 = vmul.f32 1.0, %v721
    %v723 = vrcp.pop %v714
    %v724 = vmul.f32 1.0, %v723
    %v725 = vrcp.pop %v715
    %v726 = vmul.f32 1.0, %v725
    %v727 = vrcp.pop %v716
    %v728 = vmul.f32 1.0, %v727
    %v729 = vrcp.pop %v717
    %v730 = vmul.f32 1.0, %v729
    %v731 = vrcp.pop %v718
    %v732 = vmul.f32 1.0, %v731
    %733 = vst [vmem:[#allocation10] sm:$0xff] %v720
    %734 = vst [vmem:[#allocation10 + $0x8] sm:$0xff] %v722
    %735 = vst [vmem:[#allocation10 + $0x10] sm:$0xff] %v724
    %736 = vst [vmem:[#allocation10 + $0x18] sm:$0xff] %v726
    %737 = vst [vmem:[#allocation10 + $0x20] sm:$0xff] %v728
    %738 = vst [vmem:[#allocation10 + $0x28] sm:$0xff] %v730
    %739 = vst [vmem:[#allocation10 + $0x30] sm:$0xff] %v732
    // Predicated region
    $region46: #{tpu_custom_call.1} parent=1 // pred_check
      _
    $region47: #{tpu_custom_call.1} parent=1 // pred_check_branch
      %741 = sbr.rel (0) target = $region49
    $region48: #{tpu_custom_call.1} parent=1 // pred_region
      %s743 = ssub.s32 896, 896
      %744 = vsyncadd [#allocation4], %s743
      %s746 = sshll.u32 [#allocation10], 4
      %s747 = int_to_ptr.vmem [resolvable:$true] %s746
      %749 = dma.vmem_to_hbm [thread:$0]  %s747, 896, %s7, [#allocation4]
    $region49: #{tpu_custom_call.1} parent=1 // pred_fallthru
      _
    // Predicated region
    $region50: #{tpu_custom_call.1} parent=1 // pred_check
      _
    $region51: #{tpu_custom_call.1} parent=1 // pred_check_branch
      %751 = sbr.rel (0) target = $region53
    $region52: #{tpu_custom_call.1} parent=1 // pred_region
      %752 = dma.done [#allocation4], 896
    $region53: #{tpu_custom_call.1} parent=1 // pred_fallthru
      _
    %753 = vsyncpa [#allocation3], 1
    %754 = vsyncpa [#allocation6], 1
    %755 = vsyncpa [#allocation9], 1
    %756 = vsyncpa [#allocation4], 1

</llo_original>
